<compile_context>
chip_gen: v5e
topology: v5e:2x2
jax: 0.10.0
libtpu: 0.0.40
codegen_flags: <defaults>
</compile_context>

<pallas_src>
import jax
import jax.numpy as jnp
from jax.experimental import pallas as pl
from jax.experimental.pallas import tpu as pltpu

_LANE = 128
_NEG_BIG = -1e30  # bias for padded (fake) classes -> exp() underflows to 0 in the LSE


def _disc_kernel(x_ref, w1_ref, b1_ref, w2_ref, b2_ref, w3_ref, b3_ref, o_ref):
    # hidden layer 0: Linear -> ReLU (Dropout == identity in eval mode)
    h = jnp.dot(x_ref[...], w1_ref[...], preferred_element_type=jnp.float32)
    h = jnp.maximum(h + b1_ref[...], 0.0)

    # hidden layer 1: Linear -> ReLU (Dropout == identity in eval mode)
    h = jnp.dot(h.astype(w2_ref.dtype), w2_ref[...], preferred_element_type=jnp.float32)
    h = jnp.maximum(h + b2_ref[...], 0.0)

    # classifier: Linear(H -> Cp); padded class columns have weight 0 and bias -1e30
    logits = jnp.dot(h.astype(w3_ref.dtype), w3_ref[...], preferred_element_type=jnp.float32)
    logits = logits + b3_ref[...]

    # log_softmax over the class axis. Padded columns: shifted ~ -1e30, exp -> 0,
    # so the log-sum-exp over 128 lanes equals the LSE over the real C classes.
    m = jnp.max(logits, axis=1, keepdims=True)
    shifted = logits - m
    lse = jnp.log(jnp.sum(jnp.exp(shifted), axis=1, keepdims=True))
    o_ref[...] = shifted - lse


def _pick_block_b(B):
    # Prefer big M tiles (MXU fill + amortize ~0.35us/grid-step), keep >= 2 grid
    # steps when possible (v7x has 2 TensorCores), multiples of 16 for bf16 sublanes.
    for bb in (256, 128, 64, 32, 16, 8):
        if B % bb == 0 and (B // bb) >= 2:
            return bb
    return B  # full-array block (exempt from the (8,128) divisibility rule)


def _vmem_estimate(block_b, H, Cp):
    dbl = 2  # double-buffered pipeline buffers
    b = dbl * block_b * H * 2          # x tile (bf16)
    b += dbl * 2 * H * H * 2           # w1, w2 (bf16)
    b += dbl * H * Cp * 2              # w3 padded (bf16)
    b += dbl * (2 * H + Cp) * 4        # biases (f32)
    b += dbl * block_b * Cp * 4        # output tile (f32)
    return b


@jax.jit
def discriminator_forward(x, w1, b1, w2, b2, w3, b3):
    B, H = x.shape
    C = w3.shape[1]
    Cp = max(_LANE, ((C + _LANE - 1) // _LANE) * _LANE)  # lane-dense class dim

    block_b = _pick_block_b(B)
    grid = (B // block_b,)

    # Lane-dense classifier: zero-pad weights, -1e30-pad bias.
    w3p = jnp.zeros((H, Cp), jnp.float32).at[:, :C].set(w3.astype(jnp.float32))
    b3p = jnp.full((1, Cp), _NEG_BIG, jnp.float32).at[:, :C].set(
        b3.reshape(1, C).astype(jnp.float32))

    # bf16 MXU inputs, f32 accumulation / biases / softmax.
    xb = x.astype(jnp.bfloat16)
    w1b = w1.astype(jnp.bfloat16)
    w2b = w2.astype(jnp.bfloat16)
    w3b = w3p.astype(jnp.bfloat16)
    b1f = b1.reshape(1, H).astype(jnp.float32)
    b2f = b2.reshape(1, H).astype(jnp.float32)

    # Only set an explicit VMEM limit when the footprint is actually large
    # (e.g. big H on v7x's 64 MiB VMEM); for large H one could additionally
    # single-buffer the grid-invariant weights (pipeline_mode=pl.Buffered(1)).
    vmem_needed = _vmem_estimate(block_b, H, Cp)
    vmem_limit = None
    if vmem_needed > (24 << 20):
        vmem_limit = min(vmem_needed + (vmem_needed // 2) + (4 << 20), 100 << 20)

    cost = pl.CostEstimate(
        flops=2 * B * H * (H + H + Cp),
        transcendentals=B * Cp,  # exp in softmax (+ log, negligible)
        bytes_accessed=(B * H * 2 + 2 * H * H * 2 + H * Cp * 2
                        + (2 * H + Cp) * 4 + B * Cp * 4),
    )

    full = lambda shape: pl.BlockSpec(shape, lambda i: (0, 0))

    out_padded = pl.pallas_call(
        _disc_kernel,
        out_shape=jax.ShapeDtypeStruct((B, Cp), jnp.float32),
        grid_spec=pltpu.PrefetchScalarGridSpec(
            num_scalar_prefetch=0,
            grid=grid,
            in_specs=[
                pl.BlockSpec((block_b, H), lambda i: (i, 0)),   # x tile (bf16)
                full((H, H)), full((1, H)),                     # layer 0 (w bf16, b f32)
                full((H, H)), full((1, H)),                     # layer 1
                full((H, Cp)), full((1, Cp)),                   # classifier (padded)
            ],
            out_specs=pl.BlockSpec((block_b, Cp), lambda i: (i, 0)),
        ),
        compiler_params=pltpu.CompilerParams(
            dimension_semantics=("parallel",),
            vmem_limit_bytes=vmem_limit,
        ),
        cost_estimate=cost,
    )(xb, w1b, b1f, w2b, b2f, w3b, b3p)

    # drop the padded fake classes
    return out_padded[:, :C]


def _reference(x, w1, b1, w2, b2, w3, b3):
    h = jnp.maximum(x @ w1 + b1, 0.0)
    h = jnp.maximum(h @ w2 + b2, 0.0)
    logits = h @ w3 + b3
    return jax.nn.log_softmax(logits, axis=1)


if __name__ == "__main__":
    # small shapes consistent with the module: batch=256, hidden_size=128, num_classes=8
    B, H, C = 256, 128, 8

    key = jax.random.PRNGKey(0)
    kx, k1, k2, k3, kb1, kb2, kb3 = jax.random.split(key, 7)

    x = jax.random.normal(kx, (B, H), dtype=jnp.float32)

    # deterministic parameter init (synthetic; shapes from nn.Linear in __init__)
    scale = 1.0 / jnp.sqrt(jnp.float32(H))
    w1 = jax.random.uniform(k1, (H, H), jnp.float32, -scale, scale)
    b1 = jax.random.uniform(kb1, (1, H), jnp.float32, -scale, scale)
    w2 = jax.random.uniform(k2, (H, H), jnp.float32, -scale, scale)
    b2 = jax.random.uniform(kb2, (1, H), jnp.float32, -scale, scale)
    w3 = jax.random.uniform(k3, (H, C), jnp.float32, -scale, scale)
    b3 = jax.random.uniform(kb3, (1, C), jnp.float32, -scale, scale)

    out = discriminator_forward(x, w1, b1, w2, b2, w3, b3)
    out = jax.block_until_ready(out)

    ref = _reference(x, w1, b1, w2, b2, w3, b3)
    assert out.shape == (B, C)
    # bf16 matmul inputs with f32 accumulation -> slightly loosened tolerance
    assert jnp.allclose(out, ref, atol=5e-2, rtol=5e-2), "mismatch vs reference"
    # log_softmax rows must exponentiate-and-sum to 1 (padded classes contribute 0)
    assert jnp.allclose(jnp.sum(jnp.exp(out), axis=1), 1.0, atol=1e-3)

    print("KERNEL_OK")
</pallas_src>

<mosaic_0001>
module attributes {stable_mosaic.version = 11 : i64} {
  func.func @_disc_kernel(%arg0: i32, %arg1: memref<128x128xbf16, #tpu.memory_space<vmem>>, %arg2: memref<128x128xbf16, #tpu.memory_space<vmem>>, %arg3: memref<1x128xf32, #tpu.memory_space<vmem>>, %arg4: memref<128x128xbf16, #tpu.memory_space<vmem>>, %arg5: memref<1x128xf32, #tpu.memory_space<vmem>>, %arg6: memref<128x128xbf16, #tpu.memory_space<vmem>>, %arg7: memref<1x128xf32, #tpu.memory_space<vmem>>, %arg8: memref<128x128xf32, #tpu.memory_space<vmem>>) attributes {dimension_semantics = [#tpu.dimension_semantics<parallel>], iteration_bounds = array<i64: 2>, scalar_prefetch = 0 : i64, scratch_operands = 0 : i64, tpu.core_type = #tpu.core_type<tc>, window_params = [{transform_indices = @transform_0, window_bounds = array<i64: 128, 128>}, {pipeline_mode = #tpu.pipeline_mode<synchronous>, transform_indices = @transform_1, window_bounds = array<i64: 128, 128>}, {pipeline_mode = #tpu.pipeline_mode<synchronous>, transform_indices = @transform_2, window_bounds = array<i64: 1, 128>}, {pipeline_mode = #tpu.pipeline_mode<synchronous>, transform_indices = @transform_3, window_bounds = array<i64: 128, 128>}, {pipeline_mode = #tpu.pipeline_mode<synchronous>, transform_indices = @transform_4, window_bounds = array<i64: 1, 128>}, {pipeline_mode = #tpu.pipeline_mode<synchronous>, transform_indices = @transform_5, window_bounds = array<i64: 128, 128>}, {pipeline_mode = #tpu.pipeline_mode<synchronous>, transform_indices = @transform_6, window_bounds = array<i64: 1, 128>}, {transform_indices = @transform_7, window_bounds = array<i64: 128, 128>}]} {
    %c0 = arith.constant 0 : index
    %c0_0 = arith.constant 0 : index
    %0 = vector.load %arg1[%c0, %c0_0] : memref<128x128xbf16, #tpu.memory_space<vmem>>, vector<128x128xbf16>
    %c0_1 = arith.constant 0 : index
    %c0_2 = arith.constant 0 : index
    %1 = vector.load %arg2[%c0_1, %c0_2] : memref<128x128xbf16, #tpu.memory_space<vmem>>, vector<128x128xbf16>
    %cst = arith.constant dense<0.000000e+00> : vector<128x128xf32>
    %2 = tpu.matmul %0, %1, %cst {dimension_numbers = #tpu.dot_dimension_numbers<[1], [0], [0], [1], [0, 0, 1, 1], [], []>} : vector<128x128xbf16>, vector<128x128xbf16>, vector<128x128xf32> -> vector<128x128xf32>
    %c0_3 = arith.constant 0 : index
    %c0_4 = arith.constant 0 : index
    %3 = vector.load %arg3[%c0_3, %c0_4] : memref<1x128xf32, #tpu.memory_space<vmem>>, vector<1x128xf32>
    %4 = vector.broadcast %3 : vector<1x128xf32> to vector<128x128xf32>
    %5 = arith.addf %2, %4 : vector<128x128xf32>
    %cst_5 = arith.constant 0.000000e+00 : f32
    %6 = vector.broadcast %cst_5 : f32 to vector<128x128xf32>
    %7 = arith.maximumf %5, %6 : vector<128x128xf32>
    %8 = arith.truncf %7 : vector<128x128xf32> to vector<128x128xbf16>
    %c0_6 = arith.constant 0 : index
    %c0_7 = arith.constant 0 : index
    %9 = vector.load %arg4[%c0_6, %c0_7] : memref<128x128xbf16, #tpu.memory_space<vmem>>, vector<128x128xbf16>
    %cst_8 = arith.constant dense<0.000000e+00> : vector<128x128xf32>
    %10 = tpu.matmul %8, %9, %cst_8 {dimension_numbers = #tpu.dot_dimension_numbers<[1], [0], [0], [1], [0, 0, 1, 1], [], []>} : vector<128x128xbf16>, vector<128x128xbf16>, vector<128x128xf32> -> vector<128x128xf32>
    %c0_9 = arith.constant 0 : index
    %c0_10 = arith.constant 0 : index
    %11 = vector.load %arg5[%c0_9, %c0_10] : memref<1x128xf32, #tpu.memory_space<vmem>>, vector<1x128xf32>
    %12 = vector.broadcast %11 : vector<1x128xf32> to vector<128x128xf32>
    %13 = arith.addf %10, %12 : vector<128x128xf32>
    %cst_11 = arith.constant 0.000000e+00 : f32
    %14 = vector.broadcast %cst_11 : f32 to vector<128x128xf32>
    %15 = arith.maximumf %13, %14 : vector<128x128xf32>
    %16 = arith.truncf %15 : vector<128x128xf32> to vector<128x128xbf16>
    %c0_12 = arith.constant 0 : index
    %c0_13 = arith.constant 0 : index
    %17 = vector.load %arg6[%c0_12, %c0_13] : memref<128x128xbf16, #tpu.memory_space<vmem>>, vector<128x128xbf16>
    %cst_14 = arith.constant dense<0.000000e+00> : vector<128x128xf32>
    %18 = tpu.matmul %16, %17, %cst_14 {dimension_numbers = #tpu.dot_dimension_numbers<[1], [0], [0], [1], [0, 0, 1, 1], [], []>} : vector<128x128xbf16>, vector<128x128xbf16>, vector<128x128xf32> -> vector<128x128xf32>
    %c0_15 = arith.constant 0 : index
    %c0_16 = arith.constant 0 : index
    %19 = vector.load %arg7[%c0_15, %c0_16] : memref<1x128xf32, #tpu.memory_space<vmem>>, vector<1x128xf32>
    %20 = vector.broadcast %19 : vector<1x128xf32> to vector<128x128xf32>
    %21 = arith.addf %18, %20 : vector<128x128xf32>
    %cst_17 = arith.constant dense<0xFF800000> : vector<128xf32>
    %22 = vector.multi_reduction <maximumf>, %21, %cst_17 [1] : vector<128x128xf32> to vector<128xf32>
    %23 = vector.shape_cast %22 : vector<128xf32> to vector<128x1xf32>
    %24 = vector.broadcast %23 : vector<128x1xf32> to vector<128x128xf32>
    %25 = arith.subf %21, %24 : vector<128x128xf32>
    %26 = math.exp %25 : vector<128x128xf32>
    %cst_18 = arith.constant dense<0.000000e+00> : vector<128xf32>
    %27 = vector.multi_reduction <add>, %26, %cst_18 [1] : vector<128x128xf32> to vector<128xf32>
    %28 = vector.shape_cast %27 : vector<128xf32> to vector<128x1xf32>
    %29 = math.log %28 : vector<128x1xf32>
    %30 = vector.broadcast %29 : vector<128x1xf32> to vector<128x128xf32>
    %31 = arith.subf %25, %30 : vector<128x128xf32>
    %c0_19 = arith.constant 0 : index
    %c0_20 = arith.constant 0 : index
    %32 = vector.load %arg8[%c0_19, %c0_20] : memref<128x128xf32, #tpu.memory_space<vmem>>, vector<128x128xf32>
    tpu.vector_store %arg8[%c0_19, %c0_20], %31 {strides = array<i32>} : memref<128x128xf32, #tpu.memory_space<vmem>>, vector<128x128xf32>,
    return
  }
  func.func @transform_0(%arg0: i32) -> (i32, i32) {
    %c0_i32 = arith.constant 0 : i32
    %c0_i32_0 = arith.constant 0 : i32
    return %arg0, %c0_i32 : i32, i32
  }
  func.func @transform_1(%arg0: i32) -> (i32, i32) {
    %c0_i32 = arith.constant 0 : i32
    %c0_i32_0 = arith.constant 0 : i32
    %c0_i32_1 = arith.constant 0 : i32
    return %c0_i32, %c0_i32_0 : i32, i32
  }
  func.func @transform_2(%arg0: i32) -> (i32, i32) {
    %c0_i32 = arith.constant 0 : i32
    %c0_i32_0 = arith.constant 0 : i32
    %c0_i32_1 = arith.constant 0 : i32
    return %c0_i32, %c0_i32_0 : i32, i32
  }
  func.func @transform_3(%arg0: i32) -> (i32, i32) {
    %c0_i32 = arith.constant 0 : i32
    %c0_i32_0 = arith.constant 0 : i32
    %c0_i32_1 = arith.constant 0 : i32
    return %c0_i32, %c0_i32_0 : i32, i32
  }
  func.func @transform_4(%arg0: i32) -> (i32, i32) {
    %c0_i32 = arith.constant 0 : i32
    %c0_i32_0 = arith.constant 0 : i32
    %c0_i32_1 = arith.constant 0 : i32
    return %c0_i32, %c0_i32_0 : i32, i32
  }
  func.func @transform_5(%arg0: i32) -> (i32, i32) {
    %c0_i32 = arith.constant 0 : i32
    %c0_i32_0 = arith.constant 0 : i32
    %c0_i32_1 = arith.constant 0 : i32
    return %c0_i32, %c0_i32_0 : i32, i32
  }
  func.func @transform_6(%arg0: i32) -> (i32, i32) {
    %c0_i32 = arith.constant 0 : i32
    %c0_i32_0 = arith.constant 0 : i32
    %c0_i32_1 = arith.constant 0 : i32
    return %c0_i32, %c0_i32_0 : i32, i32
  }
  func.func @transform_7(%arg0: i32) -> (i32, i32) {
    %c0_i32 = arith.constant 0 : i32
    %c0_i32_0 = arith.constant 0 : i32
    return %arg0, %c0_i32 : i32, i32
  }
}

</mosaic_0001>

<llo_original>
// kernel: discriminator_forward.1
$region0: #{discriminator_forward.1}
  #allocation0 [shape = 'u32[]', space=smem, size = 0x4, offset = 0x4, fixed_abs, tag = 'smem constant byte address 0x4 - core index']
  #allocation1 [shape = 'u32[72,128]{1,0:T(1,128)}', space=vmem, size = 0x9000, scoped, tag = 'internal scratch']
  %s0 = inlined_call_operand.vmem [shape: bf16[256,128], index: 0, kind: input, shape index: {}]
  %s1 = inlined_call_operand.vmem [shape: bf16[128,128], index: 1, kind: input, shape index: {}]
  %s2 = inlined_call_operand.vmem [shape: f32[1,128], index: 2, kind: input, shape index: {}]
  %s3 = inlined_call_operand.vmem [shape: bf16[128,128], index: 3, kind: input, shape index: {}]
  %s4 = inlined_call_operand.vmem [shape: f32[1,128], index: 4, kind: input, shape index: {}]
  %s5 = inlined_call_operand.vmem [shape: bf16[128,128], index: 5, kind: input, shape index: {}]
  %s6 = inlined_call_operand.vmem [shape: f32[1,128], index: 6, kind: input, shape index: {}]
  %s7 = inlined_call_operand.vmem [shape: f32[256,128], index: 7, kind: output, shape index: {}]
  %s8 = sld [smem:[#allocation0]]
  $region61: #{discriminator_forward.1} parent=0
    _
  %s10 = ssub.s32 1, %s8
  %s11 = scalar_select 0, %s10, %s8
  loop: start=0, step=1, limit=4
  $region2: #{discriminator_forward.1} parent=0 // loop_pre_header
    _
  $region3: #{discriminator_forward.1} parent=0 // loop_header
    %s13 = sphi 0, %s17
    %p14 = scmp.ge.s32.totalorder %s13, 4
    %s23 = sphi 0, %s25
    %s26 = sphi 0, %s23
    %s27 = sphi 0, %s26
    %s43 = sphi 0, %s27
    %s47 = sphi 0, %s47
    %s49 = sphi 0, %s47
    %s50 = sphi 0, %s49
    %s64 = sphi 0, %s50
    %s68 = sphi 0, %s68
    %s70 = sphi 0, %s68
    %s71 = sphi 0, %s70
    %s85 = sphi 0, %s71
    %s89 = sphi 0, %s89
    %s91 = sphi 0, %s89
    %s92 = sphi 0, %s91
    %s106 = sphi 0, %s92
    %s110 = sphi 0, %s110
    %s112 = sphi 0, %s110
    %s113 = sphi 0, %s112
    %s127 = sphi 0, %s113
    %s131 = sphi 0, %s131
    %s133 = sphi 0, %s131
    %s134 = sphi 0, %s133
    %s148 = sphi 0, %s134
    %s152 = sphi 0, %s152
    %s154 = sphi 0, %s152
    %s155 = sphi 0, %s154
    %s169 = sphi 0, %s155
    %s175 = sphi 0, %s177
    %s178 = sphi 0, %s175
    %s179 = sphi 0, %s178
    %s195 = sphi 0, %s179
  $region4: #{discriminator_forward.1} parent=0 // loop_header_branch
    %16 = sbr.rel (%p14) target = $region8
  $region5: #{discriminator_forward.1} parent=0 // loop_body
    %s18 = ssub.s32 %s13, 1
    %s19 = ssub.s32 %s13, 2
    %s20 = sadd.s32 %s13, 1
    %s21 = ssub.s32 %s13, %s20
    %p22 = scmp.eq.s32.totalorder %s21, 0
    %s24 = sadd.s32 %s23, 1
    %s25 = scalar_select %p22, %s23, %s24
    %p28 = pneg %p22
    %p29 = scmp.eq.s32.totalorder %s13, 1
    %p30 = por %p28, %p29
    %p31 = scmp.ne.s32.totalorder %s23, %s26
    %p32 = scmp.eq.s32.totalorder %s13, 0
    %p33 = por %p31, %p32
    %p34 = scmp.ne.s32.totalorder %s23, %s26
    %p35 = scmp.eq.s32.totalorder %s18, 1
    %p36 = por %p34, %p35
    %p37 = scmp.ne.s32.totalorder %s26, %s27
    %p38 = scmp.eq.s32.totalorder %s18, 0
    %p39 = por %p37, %p38
    %p40 = scmp.ne.s32.totalorder %s26, %s27
    %p41 = scmp.eq.s32.totalorder %s19, 1
    %p42 = por %p40, %p41
    %p44 = scmp.ne.s32.totalorder %s27, %s43
    %p45 = scmp.eq.s32.totalorder %s19, 0
    %p46 = por %p44, %p45
    %s48 = sadd.s32 %s47, 1
    %p51 = scmp.eq.s32.totalorder %s13, 1
    %p52 = scmp.ne.s32.totalorder %s47, %s49
    %p53 = scmp.eq.s32.totalorder %s13, 0
    %p54 = por %p52, %p53
    %p55 = scmp.ne.s32.totalorder %s47, %s49
    %p56 = scmp.eq.s32.totalorder %s18, 1
    %p57 = por %p55, %p56
    %p58 = scmp.ne.s32.totalorder %s49, %s50
    %p59 = scmp.eq.s32.totalorder %s18, 0
    %p60 = por %p58, %p59
    %p61 = scmp.ne.s32.totalorder %s49, %s50
    %p62 = scmp.eq.s32.totalorder %s19, 1
    %p63 = por %p61, %p62
    %p65 = scmp.ne.s32.totalorder %s50, %s64
    %p66 = scmp.eq.s32.totalorder %s19, 0
    %p67 = por %p65, %p66
    %s69 = sadd.s32 %s68, 1
    %p72 = scmp.eq.s32.totalorder %s13, 1
    %p73 = scmp.ne.s32.totalorder %s68, %s70
    %p74 = scmp.eq.s32.totalorder %s13, 0
    %p75 = por %p73, %p74
    %p76 = scmp.ne.s32.totalorder %s68, %s70
    %p77 = scmp.eq.s32.totalorder %s18, 1
    %p78 = por %p76, %p77
    %p79 = scmp.ne.s32.totalorder %s70, %s71
    %p80 = scmp.eq.s32.totalorder %s18, 0
    %p81 = por %p79, %p80
    %p82 = scmp.ne.s32.totalorder %s70, %s71
    %p83 = scmp.eq.s32.totalorder %s19, 1
    %p84 = por %p82, %p83
    %p86 = scmp.ne.s32.totalorder %s71, %s85
    %p87 = scmp.eq.s32.totalorder %s19, 0
    %p88 = por %p86, %p87
    %s90 = sadd.s32 %s89, 1
    %p93 = scmp.eq.s32.totalorder %s13, 1
    %p94 = scmp.ne.s32.totalorder %s89, %s91
    %p95 = scmp.eq.s32.totalorder %s13, 0
    %p96 = por %p94, %p95
    %p97 = scmp.ne.s32.totalorder %s89, %s91
    %p98 = scmp.eq.s32.totalorder %s18, 1
    %p99 = por %p97, %p98
    %p100 = scmp.ne.s32.totalorder %s91, %s92
    %p101 = scmp.eq.s32.totalorder %s18, 0
    %p102 = por %p100, %p101
    %p103 = scmp.ne.s32.totalorder %s91, %s92
    %p104 = scmp.eq.s32.totalorder %s19, 1
    %p105 = por %p103, %p104
    %p107 = scmp.ne.s32.totalorder %s92, %s106
    %p108 = scmp.eq.s32.totalorder %s19, 0
    %p109 = por %p107, %p108
    %s111 = sadd.s32 %s110, 1
    %p114 = scmp.eq.s32.totalorder %s13, 1
    %p115 = scmp.ne.s32.totalorder %s110, %s112
    %p116 = scmp.eq.s32.totalorder %s13, 0
    %p117 = por %p115, %p116
    %p118 = scmp.ne.s32.totalorder %s110, %s112
    %p119 = scmp.eq.s32.totalorder %s18, 1
    %p120 = por %p118, %p119
    %p121 = scmp.ne.s32.totalorder %s112, %s113
    %p122 = scmp.eq.s32.totalorder %s18, 0
    %p123 = por %p121, %p122
    %p124 = scmp.ne.s32.totalorder %s112, %s113
    %p125 = scmp.eq.s32.totalorder %s19, 1
    %p126 = por %p124, %p125
    %p128 = scmp.ne.s32.totalorder %s113, %s127
    %p129 = scmp.eq.s32.totalorder %s19, 0
    %p130 = por %p128, %p129
    %s132 = sadd.s32 %s131, 1
    %p135 = scmp.eq.s32.totalorder %s13, 1
    %p136 = scmp.ne.s32.totalorder %s131, %s133
    %p137 = scmp.eq.s32.totalorder %s13, 0
    %p138 = por %p136, %p137
    %p139 = scmp.ne.s32.totalorder %s131, %s133
    %p140 = scmp.eq.s32.totalorder %s18, 1
    %p141 = por %p139, %p140
    %p142 = scmp.ne.s32.totalorder %s133, %s134
    %p143 = scmp.eq.s32.totalorder %s18, 0
    %p144 = por %p142, %p143
    %p145 = scmp.ne.s32.totalorder %s133, %s134
    %p146 = scmp.eq.s32.totalorder %s19, 1
    %p147 = por %p145, %p146
    %p149 = scmp.ne.s32.totalorder %s134, %s148
    %p150 = scmp.eq.s32.totalorder %s19, 0
    %p151 = por %p149, %p150
    %s153 = sadd.s32 %s152, 1
    %p156 = scmp.eq.s32.totalorder %s13, 1
    %p157 = scmp.ne.s32.totalorder %s152, %s154
    %p158 = scmp.eq.s32.totalorder %s13, 0
    %p159 = por %p157, %p158
    %p160 = scmp.ne.s32.totalorder %s152, %s154
    %p161 = scmp.eq.s32.totalorder %s18, 1
    %p162 = por %p160, %p161
    %p163 = scmp.ne.s32.totalorder %s154, %s155
    %p164 = scmp.eq.s32.totalorder %s18, 0
    %p165 = por %p163, %p164
    %p166 = scmp.ne.s32.totalorder %s154, %s155
    %p167 = scmp.eq.s32.totalorder %s19, 1
    %p168 = por %p166, %p167
    %p170 = scmp.ne.s32.totalorder %s155, %s169
    %p171 = scmp.eq.s32.totalorder %s19, 0
    %p172 = por %p170, %p171
    %s173 = ssub.s32 %s13, %s20
    %p174 = scmp.eq.s32.totalorder %s173, 0
    %s176 = sadd.s32 %s175, 1
    %s177 = scalar_select %p174, %s175, %s176
    %p180 = pneg %p174
    %p181 = scmp.eq.s32.totalorder %s13, 1
    %p182 = por %p180, %p181
    %p183 = scmp.ne.s32.totalorder %s175, %s178
    %p184 = scmp.eq.s32.totalorder %s13, 0
    %p185 = por %p183, %p184
    %p186 = scmp.ne.s32.totalorder %s175, %s178
    %p187 = scmp.eq.s32.totalorder %s18, 1
    %p188 = por %p186, %p187
    %p189 = scmp.ne.s32.totalorder %s178, %s179
    %p190 = scmp.eq.s32.totalorder %s18, 0
    %p191 = por %p189, %p190
    %p192 = scmp.ne.s32.totalorder %s178, %s179
    %p193 = scmp.eq.s32.totalorder %s19, 1
    %p194 = por %p192, %p193
    %p196 = scmp.ne.s32.totalorder %s179, %s195
    %p197 = scmp.eq.s32.totalorder %s19, 0
    %p198 = por %p196, %p197
    %p199 = scmp.le.s32.totalorder 1, %s13
    %p200 = scmp.lt.s32.totalorder %s13, 3
    %p201 = pnand %p199, %p200
    %p202 = pneg %p201
    // Predicated region
    $region9: #{discriminator_forward.1} parent=5 // pred_check
      _
    $region10: #{discriminator_forward.1} parent=5 // pred_check_branch
      %204 = sbr.rel (%p201) target = $region12
    $region11: #{discriminator_forward.1} parent=5 // pred_region
      %s205 = ssub.s32 %s13, 1
      // Predicated region
      $region13: #{discriminator_forward.1} parent=11 // pred_check
        %p206 = pneg %p60
      $region14: #{discriminator_forward.1} parent=11 // pred_check_branch
        %208 = sbr.rel (%p206) target = $region16
      $region15: #{discriminator_forward.1} parent=11 // pred_region
        _
      $region16: #{discriminator_forward.1} parent=11 // pred_fallthru
        _
      // Predicated region
      $region17: #{discriminator_forward.1} parent=11 // pred_check
        %p209 = pneg %p81
      $region18: #{discriminator_forward.1} parent=11 // pred_check_branch
        %211 = sbr.rel (%p209) target = $region20
      $region19: #{discriminator_forward.1} parent=11 // pred_region
        _
      $region20: #{discriminator_forward.1} parent=11 // pred_fallthru
        _
      // Predicated region
      $region21: #{discriminator_forward.1} parent=11 // pred_check
        %p212 = pneg %p102
      $region22: #{discriminator_forward.1} parent=11 // pred_check_branch
        %214 = sbr.rel (%p212) target = $region24
      $region23: #{discriminator_forward.1} parent=11 // pred_region
        _
      $region24: #{discriminator_forward.1} parent=11 // pred_fallthru
        _
      // Predicated region
      $region25: #{discriminator_forward.1} parent=11 // pred_check
        %p215 = pneg %p123
      $region26: #{discriminator_forward.1} parent=11 // pred_check_branch
        %217 = sbr.rel (%p215) target = $region28
      $region27: #{discriminator_forward.1} parent=11 // pred_region
        _
      $region28: #{discriminator_forward.1} parent=11 // pred_fallthru
        _
      // Predicated region
      $region29: #{discriminator_forward.1} parent=11 // pred_check
        %p218 = pneg %p144
      $region30: #{discriminator_forward.1} parent=11 // pred_check_branch
        %220 = sbr.rel (%p218) target = $region32
      $region31: #{discriminator_forward.1} parent=11 // pred_region
        _
      $region32: #{discriminator_forward.1} parent=11 // pred_fallthru
        _
      // Predicated region
      $region33: #{discriminator_forward.1} parent=11 // pred_check
        %p221 = pneg %p165
      $region34: #{discriminator_forward.1} parent=11 // pred_check_branch
        %223 = sbr.rel (%p221) target = $region36
      $region35: #{discriminator_forward.1} parent=11 // pred_region
        _
      $region36: #{discriminator_forward.1} parent=11 // pred_fallthru
        _
    $region12: #{discriminator_forward.1} parent=5 // pred_fallthru
      _
    %p224 = scmp.lt.s32.totalorder %s13, 2
    // Predicated region
    $region37: #{discriminator_forward.1} parent=5 // pred_check
      %p225 = pneg %p224
    $region38: #{discriminator_forward.1} parent=5 // pred_check_branch
      %227 = sbr.rel (%p225) target = $region40
    $region39: #{discriminator_forward.1} parent=5 // pred_region
      // Predicated region
      $region41: #{discriminator_forward.1} parent=39 // pred_check
        %p228 = pneg %p33
      $region42: #{discriminator_forward.1} parent=39 // pred_check_branch
        %230 = sbr.rel (%p228) target = $region44
      $region43: #{discriminator_forward.1} parent=39 // pred_region
        %s231 = smul.u32 16, %s13
        %p232 = scmp.lt.s32.totalorder %s231, 31
        %s233 = scalar_select %p232, %s231, 31
        %s234 = smul.addr %s233, 4
        %s235 = scalar_lea.vmem %s0, %s234
        %s236 = smul.u32 16, %s13
      $region44: #{discriminator_forward.1} parent=39 // pred_fallthru
        _
    $region40: #{discriminator_forward.1} parent=5 // pred_fallthru
      _
    %p237 = scmp.le.s32.totalorder 1, %s13
    %p238 = scmp.lt.s32.totalorder %s13, 3
    %p239 = pnand %p237, %p238
    %p240 = pneg %p239
    // Predicated region
    $region45: #{discriminator_forward.1} parent=5 // pred_check
      _
    $region46: #{discriminator_forward.1} parent=5 // pred_check_branch
      %242 = sbr.rel (%p239) target = $region48
    $region47: #{discriminator_forward.1} parent=5 // pred_region
      %s243 = ssub.s32 %s13, 1
      %s244 = smul.u32 16, %s18
      %p245 = scmp.lt.s32.totalorder %s244, 31
      %s246 = scalar_select %p245, %s244, 31
      %s247 = smul.addr %s246, 4
      %s248 = scalar_lea.vmem %s0, %s247
      %p249 = pneg %p39
      %p250 = pneg %p36
      %p251 = pneg %p60
      %p252 = pneg %p57
      %p253 = pneg %p81
      %p254 = pneg %p78
      %p255 = pneg %p102
      %p256 = pneg %p99
      %p257 = pneg %p123
      %p258 = pneg %p120
      %p259 = pneg %p144
      %p260 = pneg %p141
      %p261 = pneg %p165
      %p262 = pneg %p162
      %p263 = pneg %p191
      %p264 = pneg %p188
      %s265 = smul.u32 16, %s18
      %p266 = scmp.lt.s32.totalorder %s265, 31
      %s267 = scalar_select %p266, %s265, 31
      %s268 = smul.addr %s267, 8
      %s269 = scalar_lea.vmem %s7, %s268
      %s270 = smul.u32 16, %s18
      %p271 = scmp.lt.s32.totalorder %s270, 31
      %s272 = scalar_select %p271, %s270, 31
      %s273 = smul.addr %s272, 4
      %s274 = scalar_lea.vmem %s0, %s273
      %s275 = smul.u32 16, %s18
      %s276 = smul.u32 16, %s18
      %p277 = scmp.lt.s32.totalorder %s276, 31
      %s278 = scalar_select %p277, %s276, 31
      %s279 = smul.addr %s278, 8
      %s280 = scalar_lea.vmem %s7, %s279
      %s281 = smul.u32 16, %s18
      %v282 = vld [vmem:[%s274] sm:$0xf]
      %v283 = vld [vmem:[%s274 + $0x4] sm:$0xf]
      %v284 = vld [vmem:[%s274 + $0x8] sm:$0xf]
      %v285 = vld [vmem:[%s274 + $0xc] sm:$0xf]
      %v286 = vld [vmem:[%s274 + $0x10] sm:$0xf]
      %v287 = vld [vmem:[%s274 + $0x14] sm:$0xf]
      %v288 = vld [vmem:[%s274 + $0x18] sm:$0xf]
      %v289 = vld [vmem:[%s274 + $0x1c] sm:$0xf]
      %v290 = vld [vmem:[%s274 + $0x20] sm:$0xf]
      %v291 = vld [vmem:[%s274 + $0x24] sm:$0xf]
      %v292 = vld [vmem:[%s274 + $0x28] sm:$0xf]
      %v293 = vld [vmem:[%s274 + $0x2c] sm:$0xf]
      %v294 = vld [vmem:[%s274 + $0x30] sm:$0xf]
      %v295 = vld [vmem:[%s274 + $0x34] sm:$0xf]
      %v296 = vld [vmem:[%s274 + $0x38] sm:$0xf]
      %v297 = vld [vmem:[%s274 + $0x3c] sm:$0xf]
      %v298 = vld [vmem:[%s1] sm:$0xf]
      %v299 = vld [vmem:[%s1 + $0x4] sm:$0xf]
      %v300 = vld [vmem:[%s1 + $0x8] sm:$0xf]
      %v301 = vld [vmem:[%s1 + $0xc] sm:$0xf]
      %v302 = vld [vmem:[%s1 + $0x10] sm:$0xf]
      %v303 = vld [vmem:[%s1 + $0x14] sm:$0xf]
      %v304 = vld [vmem:[%s1 + $0x18] sm:$0xf]
      %v305 = vld [vmem:[%s1 + $0x1c] sm:$0xf]
      %v306 = vld [vmem:[%s1 + $0x20] sm:$0xf]
      %v307 = vld [vmem:[%s1 + $0x24] sm:$0xf]
      %v308 = vld [vmem:[%s1 + $0x28] sm:$0xf]
      %v309 = vld [vmem:[%s1 + $0x2c] sm:$0xf]
      %v310 = vld [vmem:[%s1 + $0x30] sm:$0xf]
      %v311 = vld [vmem:[%s1 + $0x34] sm:$0xf]
      %v312 = vld [vmem:[%s1 + $0x38] sm:$0xf]
      %v313 = vld [vmem:[%s1 + $0x3c] sm:$0xf]
      %v314 = vld [vmem:[%s2] sm:$0x1]
      %v316 = vperm.slane %v314, 0
      %v334 = vunpack.c.l.b16 %v282
      %v335 = vunpack.c.l.b16 %v283
      %v336 = vunpack.c.l.b16 %v284
      %v337 = vunpack.c.l.b16 %v285
      %v338 = vunpack.c.l.b16 %v286
      %v339 = vunpack.c.l.b16 %v287
      %v340 = vunpack.c.l.b16 %v288
      %v341 = vunpack.c.l.b16 %v289
      %v342 = vunpack.c.l.b16 %v290
      %v343 = vunpack.c.l.b16 %v291
      %v344 = vunpack.c.l.b16 %v292
      %v345 = vunpack.c.l.b16 %v293
      %v346 = vunpack.c.l.b16 %v294
      %v347 = vunpack.c.l.b16 %v295
      %v348 = vunpack.c.l.b16 %v296
      %v349 = vunpack.c.l.b16 %v297
      %v350 = vpack.c.b16 %v335, %v334
      %v351 = vpack.c.b16 %v337, %v336
      %v352 = vpack.c.b16 %v339, %v338
      %v353 = vpack.c.b16 %v341, %v340
      %v354 = vpack.c.b16 %v343, %v342
      %v355 = vpack.c.b16 %v345, %v344
      %v356 = vpack.c.b16 %v347, %v346
      %v357 = vpack.c.b16 %v349, %v348
      %v382 = vunpack.c.l.b16 %v298
      %v383 = vunpack.c.l.b16 %v299
      %v384 = vunpack.c.l.b16 %v300
      %v385 = vunpack.c.l.b16 %v301
      %v386 = vunpack.c.l.b16 %v302
      %v387 = vunpack.c.l.b16 %v303
      %v388 = vunpack.c.l.b16 %v304
      %v389 = vunpack.c.l.b16 %v305
      %v390 = vunpack.c.l.b16 %v306
      %v391 = vunpack.c.l.b16 %v307
      %v392 = vunpack.c.l.b16 %v308
      %v393 = vunpack.c.l.b16 %v309
      %v394 = vunpack.c.l.b16 %v310
      %v395 = vunpack.c.l.b16 %v311
      %v396 = vunpack.c.l.b16 %v312
      %v397 = vunpack.c.l.b16 %v313
      %v398 = vpack.c.b16 %v383, %v382
      %v399 = vpack.c.b16 %v385, %v384
      %v400 = vpack.c.b16 %v387, %v386
      %v401 = vpack.c.b16 %v389, %v388
      %v402 = vpack.c.b16 %v391, %v390
      %v403 = vpack.c.b16 %v393, %v392
      %v404 = vpack.c.b16 %v395, %v394
      %v405 = vpack.c.b16 %v397, %v396
      %414 = vmatpush.bf16.msra.mxu0 %v405
      %415 = vmatpush.bf16.msra.mxu0 %v404
      %416 = vmatpush.bf16.msra.mxu0 %v403
      %417 = vmatpush.bf16.msra.mxu0 %v402
      %418 = vmatpush.bf16.msra.mxu0 %v401
      %419 = vmatpush.bf16.msra.mxu0 %v400
      %420 = vmatpush.bf16.msra.mxu0 %v399
      %421 = vmatpush.bf16.msra.mxu0 %v398
      %422 = vmatmul.bf16.gmra.mxu0 %v350
      %v423 = vpop.f32.mrf.mxu0
      %v424 = vadd.f32 %v316, %v423
      %v425 = vpop.f32.mrf.mxu0
      %v426 = vadd.f32 %v316, %v425
      %427 = vmatmul.bf16.gmra.mxu0 %v351
      %v428 = vpop.f32.mrf.mxu0
      %v429 = vadd.f32 %v316, %v428
      %v430 = vpop.f32.mrf.mxu0
      %v431 = vadd.f32 %v316, %v430
      %432 = vmatmul.bf16.gmra.mxu0 %v352
      %v433 = vpop.f32.mrf.mxu0
      %v434 = vadd.f32 %v316, %v433
      %v435 = vpop.f32.mrf.mxu0
      %v436 = vadd.f32 %v316, %v435
      %437 = vmatmul.bf16.gmra.mxu0 %v353
      %v438 = vpop.f32.mrf.mxu0
      %v439 = vadd.f32 %v316, %v438
      %v440 = vpop.f32.mrf.mxu0
      %v441 = vadd.f32 %v316, %v440
      %442 = vmatmul.bf16.gmra.mxu0 %v354
      %v443 = vpop.f32.mrf.mxu0
      %v444 = vadd.f32 %v316, %v443
      %v445 = vpop.f32.mrf.mxu0
      %v446 = vadd.f32 %v316, %v445
      %447 = vmatmul.bf16.gmra.mxu0 %v355
      %v448 = vpop.f32.mrf.mxu0
      %v449 = vadd.f32 %v316, %v448
      %v450 = vpop.f32.mrf.mxu0
      %v451 = vadd.f32 %v316, %v450
      %452 = vmatmul.bf16.gmra.mxu0 %v356
      %v453 = vpop.f32.mrf.mxu0
      %v454 = vadd.f32 %v316, %v453
      %v455 = vpop.f32.mrf.mxu0
      %v456 = vadd.f32 %v316, %v455
      %457 = vmatmul.bf16.gmra.mxu0 %v357
      %v458 = vpop.f32.mrf.mxu0
      %v459 = vadd.f32 %v316, %v458
      %v460 = vpop.f32.mrf.mxu0
      %v461 = vadd.f32 %v316, %v460
      %462 = vdwg.mxu0
      %v463 = vmax.f32 %v424, 0.0
      %v464 = vmax.f32 %v426, 0.0
      %v465 = vmax.f32 %v429, 0.0
      %v466 = vmax.f32 %v431, 0.0
      %v467 = vmax.f32 %v434, 0.0
      %v468 = vmax.f32 %v436, 0.0
      %v469 = vmax.f32 %v439, 0.0
      %v470 = vmax.f32 %v441, 0.0
      %v471 = vmax.f32 %v444, 0.0
      %v472 = vmax.f32 %v446, 0.0
      %v473 = vmax.f32 %v449, 0.0
      %v474 = vmax.f32 %v451, 0.0
      %v475 = vmax.f32 %v454, 0.0
      %v476 = vmax.f32 %v456, 0.0
      %v477 = vmax.f32 %v459, 0.0
      %v478 = vmax.f32 %v461, 0.0
      %v479 = vpack.c.bf16 %v464, %v463
      %v480 = vpack.c.bf16 %v466, %v465
      %v481 = vpack.c.bf16 %v468, %v467
      %v482 = vpack.c.bf16 %v470, %v469
      %v483 = vpack.c.bf16 %v472, %v471
      %v484 = vpack.c.bf16 %v474, %v473
      %v485 = vpack.c.bf16 %v476, %v475
      %v486 = vpack.c.bf16 %v478, %v477
      %v487 = vld [vmem:[%s3] sm:$0xf]
      %v488 = vld [vmem:[%s3 + $0x4] sm:$0xf]
      %v489 = vld [vmem:[%s3 + $0x8] sm:$0xf]
      %v490 = vld [vmem:[%s3 + $0xc] sm:$0xf]
      %v491 = vld [vmem:[%s3 + $0x10] sm:$0xf]
      %v492 = vld [vmem:[%s3 + $0x14] sm:$0xf]
      %v493 = vld [vmem:[%s3 + $0x18] sm:$0xf]
      %v494 = vld [vmem:[%s3 + $0x1c] sm:$0xf]
      %v495 = vld [vmem:[%s3 + $0x20] sm:$0xf]
      %v496 = vld [vmem:[%s3 + $0x24] sm:$0xf]
      %v497 = vld [vmem:[%s3 + $0x28] sm:$0xf]
      %v498 = vld [vmem:[%s3 + $0x2c] sm:$0xf]
      %v499 = vld [vmem:[%s3 + $0x30] sm:$0xf]
      %v500 = vld [vmem:[%s3 + $0x34] sm:$0xf]
      %v501 = vld [vmem:[%s3 + $0x38] sm:$0xf]
      %v502 = vld [vmem:[%s3 + $0x3c] sm:$0xf]
      %v503 = vld [vmem:[%s4] sm:$0x1]
      %v505 = vperm.slane %v503, 0
      %v523 = vunpack.c.l.b16 %v487
      %v524 = vunpack.c.l.b16 %v488
      %v525 = vunpack.c.l.b16 %v489
      %v526 = vunpack.c.l.b16 %v490
      %v527 = vunpack.c.l.b16 %v491
      %v528 = vunpack.c.l.b16 %v492
      %v529 = vunpack.c.l.b16 %v493
      %v530 = vunpack.c.l.b16 %v494
      %v531 = vunpack.c.l.b16 %v495
      %v532 = vunpack.c.l.b16 %v496
      %v533 = vunpack.c.l.b16 %v497
      %v534 = vunpack.c.l.b16 %v498
      %v535 = vunpack.c.l.b16 %v499
      %v536 = vunpack.c.l.b16 %v500
      %v537 = vunpack.c.l.b16 %v501
      %v538 = vunpack.c.l.b16 %v502
      %v539 = vpack.c.b16 %v524, %v523
      %v540 = vpack.c.b16 %v526, %v525
      %v541 = vpack.c.b16 %v528, %v527
      %v542 = vpack.c.b16 %v530, %v529
      %v543 = vpack.c.b16 %v532, %v531
      %v544 = vpack.c.b16 %v534, %v533
      %v545 = vpack.c.b16 %v536, %v535
      %v546 = vpack.c.b16 %v538, %v537
      %555 = vmatpush.bf16.msra.mxu0 %v546
      %556 = vmatpush.bf16.msra.mxu0 %v545
      %557 = vmatpush.bf16.msra.mxu0 %v544
      %558 = vmatpush.bf16.msra.mxu0 %v543
      %559 = vmatpush.bf16.msra.mxu0 %v542
      %560 = vmatpush.bf16.msra.mxu0 %v541
      %561 = vmatpush.bf16.msra.mxu0 %v540
      %562 = vmatpush.bf16.msra.mxu0 %v539
      %563 = vmatmul.bf16.gmra.mxu0 %v479
      %v564 = vpop.f32.mrf.mxu0
      %v565 = vadd.f32 %v505, %v564
      %v566 = vpop.f32.mrf.mxu0
      %v567 = vadd.f32 %v505, %v566
      %568 = vmatmul.bf16.gmra.mxu0 %v480
      %v569 = vpop.f32.mrf.mxu0
      %v570 = vadd.f32 %v505, %v569
      %v571 = vpop.f32.mrf.mxu0
      %v572 = vadd.f32 %v505, %v571
      %573 = vmatmul.bf16.gmra.mxu0 %v481
      %v574 = vpop.f32.mrf.mxu0
      %v575 = vadd.f32 %v505, %v574
      %v576 = vpop.f32.mrf.mxu0
      %v577 = vadd.f32 %v505, %v576
      %578 = vmatmul.bf16.gmra.mxu0 %v482
      %v579 = vpop.f32.mrf.mxu0
      %v580 = vadd.f32 %v505, %v579
      %v581 = vpop.f32.mrf.mxu0
      %v582 = vadd.f32 %v505, %v581
      %583 = vmatmul.bf16.gmra.mxu0 %v483
      %v584 = vpop.f32.mrf.mxu0
      %v585 = vadd.f32 %v505, %v584
      %v586 = vpop.f32.mrf.mxu0
      %v587 = vadd.f32 %v505, %v586
      %588 = vmatmul.bf16.gmra.mxu0 %v484
      %v589 = vpop.f32.mrf.mxu0
      %v590 = vadd.f32 %v505, %v589
      %v591 = vpop.f32.mrf.mxu0
      %v592 = vadd.f32 %v505, %v591
      %593 = vmatmul.bf16.gmra.mxu0 %v485
      %v594 = vpop.f32.mrf.mxu0
      %v595 = vadd.f32 %v505, %v594
      %v596 = vpop.f32.mrf.mxu0
      %v597 = vadd.f32 %v505, %v596
      %598 = vmatmul.bf16.gmra.mxu0 %v486
      %v599 = vpop.f32.mrf.mxu0
      %v600 = vadd.f32 %v505, %v599
      %v601 = vpop.f32.mrf.mxu0
      %v602 = vadd.f32 %v505, %v601
      %603 = vdwg.mxu0
      %v604 = vmax.f32 %v565, 0.0
      %v605 = vmax.f32 %v567, 0.0
      %v606 = vmax.f32 %v570, 0.0
      %v607 = vmax.f32 %v572, 0.0
      %v608 = vmax.f32 %v575, 0.0
      %v609 = vmax.f32 %v577, 0.0
      %v610 = vmax.f32 %v580, 0.0
      %v611 = vmax.f32 %v582, 0.0
      %v612 = vmax.f32 %v585, 0.0
      %v613 = vmax.f32 %v587, 0.0
      %v614 = vmax.f32 %v590, 0.0
      %v615 = vmax.f32 %v592, 0.0
      %v616 = vmax.f32 %v595, 0.0
      %v617 = vmax.f32 %v597, 0.0
      %v618 = vmax.f32 %v600, 0.0
      %v619 = vmax.f32 %v602, 0.0
      %v620 = vpack.c.bf16 %v605, %v604
      %v621 = vpack.c.bf16 %v607, %v606
      %v622 = vpack.c.bf16 %v609, %v608
      %v623 = vpack.c.bf16 %v611, %v610
      %v624 = vpack.c.bf16 %v613, %v612
      %v625 = vpack.c.bf16 %v615, %v614
      %v626 = vpack.c.bf16 %v617, %v616
      %v627 = vpack.c.bf16 %v619, %v618
      %v628 = vld [vmem:[%s5] sm:$0xf]
      %v629 = vld [vmem:[%s5 + $0x4] sm:$0xf]
      %v630 = vld [vmem:[%s5 + $0x8] sm:$0xf]
      %v631 = vld [vmem:[%s5 + $0xc] sm:$0xf]
      %v632 = vld [vmem:[%s5 + $0x10] sm:$0xf]
      %v633 = vld [vmem:[%s5 + $0x14] sm:$0xf]
      %v634 = vld [vmem:[%s5 + $0x18] sm:$0xf]
      %v635 = vld [vmem:[%s5 + $0x1c] sm:$0xf]
      %v636 = vld [vmem:[%s5 + $0x20] sm:$0xf]
      %v637 = vld [vmem:[%s5 + $0x24] sm:$0xf]
      %v638 = vld [vmem:[%s5 + $0x28] sm:$0xf]
      %v639 = vld [vmem:[%s5 + $0x2c] sm:$0xf]
      %v640 = vld [vmem:[%s5 + $0x30] sm:$0xf]
      %v641 = vld [vmem:[%s5 + $0x34] sm:$0xf]
      %v642 = vld [vmem:[%s5 + $0x38] sm:$0xf]
      %v643 = vld [vmem:[%s5 + $0x3c] sm:$0xf]
      %v644 = vld [vmem:[%s6] sm:$0x1]
      %v646 = vperm.slane %v644, 0
      %v664 = vunpack.c.l.b16 %v628
      %v665 = vunpack.c.l.b16 %v629
      %v666 = vunpack.c.l.b16 %v630
      %v667 = vunpack.c.l.b16 %v631
      %v668 = vunpack.c.l.b16 %v632
      %v669 = vunpack.c.l.b16 %v633
      %v670 = vunpack.c.l.b16 %v634
      %v671 = vunpack.c.l.b16 %v635
      %v672 = vunpack.c.l.b16 %v636
      %v673 = vunpack.c.l.b16 %v637
      %v674 = vunpack.c.l.b16 %v638
      %v675 = vunpack.c.l.b16 %v639
      %v676 = vunpack.c.l.b16 %v640
      %v677 = vunpack.c.l.b16 %v641
      %v678 = vunpack.c.l.b16 %v642
      %v679 = vunpack.c.l.b16 %v643
      %v680 = vpack.c.b16 %v665, %v664
      %v681 = vpack.c.b16 %v667, %v666
      %v682 = vpack.c.b16 %v669, %v668
      %v683 = vpack.c.b16 %v671, %v670
      %v684 = vpack.c.b16 %v673, %v672
      %v685 = vpack.c.b16 %v675, %v674
      %v686 = vpack.c.b16 %v677, %v676
      %v687 = vpack.c.b16 %v679, %v678
      %696 = vmatpush.bf16.msra.mxu0 %v687
      %697 = vmatpush.bf16.msra.mxu0 %v686
      %698 = vmatpush.bf16.msra.mxu0 %v685
      %699 = vmatpush.bf16.msra.mxu0 %v684
      %700 = vmatpush.bf16.msra.mxu0 %v683
      %701 = vmatpush.bf16.msra.mxu0 %v682
      %702 = vmatpush.bf16.msra.mxu0 %v681
      %703 = vmatpush.bf16.msra.mxu0 %v680
      %704 = vmatmul.bf16.gmra.mxu0 %v620
      %v705 = vpop.f32.mrf.mxu0
      %v706 = vadd.f32 %v646, %v705
      %v707 = vpop.f32.mrf.mxu0
      %v708 = vadd.f32 %v646, %v707
      %709 = vmatmul.bf16.gmra.mxu0 %v621
      %v710 = vpop.f32.mrf.mxu0
      %v711 = vadd.f32 %v646, %v710
      %v712 = vpop.f32.mrf.mxu0
      %v713 = vadd.f32 %v646, %v712
      %714 = vmatmul.bf16.gmra.mxu0 %v622
      %v715 = vpop.f32.mrf.mxu0
      %v716 = vadd.f32 %v646, %v715
      %v717 = vpop.f32.mrf.mxu0
      %v718 = vadd.f32 %v646, %v717
      %719 = vmatmul.bf16.gmra.mxu0 %v623
      %v720 = vpop.f32.mrf.mxu0
      %v721 = vadd.f32 %v646, %v720
      %v722 = vpop.f32.mrf.mxu0
      %v723 = vadd.f32 %v646, %v722
      %724 = vmatmul.bf16.gmra.mxu0 %v624
      %v725 = vpop.f32.mrf.mxu0
      %v726 = vadd.f32 %v646, %v725
      %v727 = vpop.f32.mrf.mxu0
      %v728 = vadd.f32 %v646, %v727
      %729 = vmatmul.bf16.gmra.mxu0 %v625
      %v730 = vpop.f32.mrf.mxu0
      %v731 = vadd.f32 %v646, %v730
      %v732 = vpop.f32.mrf.mxu0
      %v733 = vadd.f32 %v646, %v732
      %734 = vmatmul.bf16.gmra.mxu0 %v626
      %v735 = vpop.f32.mrf.mxu0
      %v736 = vadd.f32 %v646, %v735
      %v737 = vpop.f32.mrf.mxu0
      %v738 = vadd.f32 %v646, %v737
      %739 = vmatmul.bf16.gmra.mxu0 %v627
      %v740 = vpop.f32.mrf.mxu0
      %v741 = vadd.f32 %v646, %v740
      %v742 = vpop.f32.mrf.mxu0
      %v743 = vadd.f32 %v646, %v742
      %744 = vdwg.mxu0
      %745 = vmax.xlane.f32.xlu0 %v706
      %v746 = vpop.xlane.xlu0 %745
      %747 = vmax.xlane.f32.xlu0 %v708
      %v748 = vpop.xlane.xlu0 %747
      %749 = vmax.xlane.f32.xlu0 %v711
      %v750 = vpop.xlane.xlu0 %749
      %751 = vmax.xlane.f32.xlu0 %v713
      %v752 = vpop.xlane.xlu0 %751
      %753 = vmax.xlane.f32.xlu0 %v716
      %v754 = vpop.xlane.xlu0 %753
      %755 = vmax.xlane.f32.xlu0 %v718
      %v756 = vpop.xlane.xlu0 %755
      %757 = vmax.xlane.f32.xlu0 %v721
      %v758 = vpop.xlane.xlu0 %757
      %759 = vmax.xlane.f32.xlu0 %v723
      %v760 = vpop.xlane.xlu0 %759
      %761 = vmax.xlane.f32.xlu0 %v726
      %v762 = vpop.xlane.xlu0 %761
      %763 = vmax.xlane.f32.xlu0 %v728
      %v764 = vpop.xlane.xlu0 %763
      %765 = vmax.xlane.f32.xlu0 %v731
      %v766 = vpop.xlane.xlu0 %765
      %767 = vmax.xlane.f32.xlu0 %v733
      %v768 = vpop.xlane.xlu0 %767
      %769 = vmax.xlane.f32.xlu0 %v736
      %v770 = vpop.xlane.xlu0 %769
      %771 = vmax.xlane.f32.xlu0 %v738
      %v772 = vpop.xlane.xlu0 %771
      %773 = vmax.xlane.f32.xlu0 %v741
      %v774 = vpop.xlane.xlu0 %773
      %775 = vmax.xlane.f32.xlu0 %v743
      %v776 = vpop.xlane.xlu0 %775
      %v777 = vsub.f32 %v706, %v746
      %v778 = vsub.f32 %v708, %v748
      %v779 = vsub.f32 %v711, %v750
      %v780 = vsub.f32 %v713, %v752
      %v781 = vsub.f32 %v716, %v754
      %v782 = vsub.f32 %v718, %v756
      %v783 = vsub.f32 %v721, %v758
      %v784 = vsub.f32 %v723, %v760
      %v785 = vsub.f32 %v726, %v762
      %v786 = vsub.f32 %v728, %v764
      %v787 = vsub.f32 %v731, %v766
      %v788 = vsub.f32 %v733, %v768
      %v789 = vsub.f32 %v736, %v770
      %v790 = vsub.f32 %v738, %v772
      %v791 = vsub.f32 %v741, %v774
      %v792 = vsub.f32 %v743, %v776
      %v793 = vmul.f32 %v777, 1.442695
      %v794 = vpow.pop %v793
      %v795 = vmul.f32 %v778, 1.442695
      %v796 = vpow.pop %v795
      %v797 = vmul.f32 %v779, 1.442695
      %v798 = vpow.pop %v797
      %v799 = vmul.f32 %v780, 1.442695
      %v800 = vpow.pop %v799
      %v801 = vmul.f32 %v781, 1.442695
      %v802 = vpow.pop %v801
      %v803 = vmul.f32 %v782, 1.442695
      %v804 = vpow.pop %v803
      %v805 = vmul.f32 %v783, 1.442695
      %v806 = vpow.pop %v805
      %v807 = vmul.f32 %v784, 1.442695
      %v808 = vpow.pop %v807
      %v809 = vmul.f32 %v785, 1.442695
      %v810 = vpow.pop %v809
      %v811 = vmul.f32 %v786, 1.442695
      %v812 = vpow.pop %v811
      %v813 = vmul.f32 %v787, 1.442695
      %v814 = vpow.pop %v813
      %v815 = vmul.f32 %v788, 1.442695
      %v816 = vpow.pop %v815
      %v817 = vmul.f32 %v789, 1.442695
      %v818 = vpow.pop %v817
      %v819 = vmul.f32 %v790, 1.442695
      %v820 = vpow.pop %v819
      %v821 = vmul.f32 %v791, 1.442695
      %v822 = vpow.pop %v821
      %v823 = vmul.f32 %v792, 1.442695
      %v824 = vpow.pop %v823
      %825 = vadd.xlane.f32.xlu0 %v794
      %v826 = vpop.xlane.xlu0 %825
      %827 = vadd.xlane.f32.xlu0 %v796
      %v828 = vpop.xlane.xlu0 %827
      %829 = vadd.xlane.f32.xlu0 %v798
      %v830 = vpop.xlane.xlu0 %829
      %831 = vadd.xlane.f32.xlu0 %v800
      %v832 = vpop.xlane.xlu0 %831
      %833 = vadd.xlane.f32.xlu0 %v802
      %v834 = vpop.xlane.xlu0 %833
      %835 = vadd.xlane.f32.xlu0 %v804
      %v836 = vpop.xlane.xlu0 %835
      %837 = vadd.xlane.f32.xlu0 %v806
      %v838 = vpop.xlane.xlu0 %837
      %839 = vadd.xlane.f32.xlu0 %v808
      %v840 = vpop.xlane.xlu0 %839
      %841 = vadd.xlane.f32.xlu0 %v810
      %v842 = vpop.xlane.xlu0 %841
      %843 = vadd.xlane.f32.xlu0 %v812
      %v844 = vpop.xlane.xlu0 %843
      %845 = vadd.xlane.f32.xlu0 %v814
      %v846 = vpop.xlane.xlu0 %845
      %847 = vadd.xlane.f32.xlu0 %v816
      %v848 = vpop.xlane.xlu0 %847
      %849 = vadd.xlane.f32.xlu0 %v818
      %v850 = vpop.xlane.xlu0 %849
      %851 = vadd.xlane.f32.xlu0 %v820
      %v852 = vpop.xlane.xlu0 %851
      %853 = vadd.xlane.f32.xlu0 %v822
      %v854 = vpop.xlane.xlu0 %853
      %855 = vadd.xlane.f32.xlu0 %v824
      %v856 = vpop.xlane.xlu0 %855
      %v857 = vlog2.pop %v826
      %v858 = vmul.f32 %v857, 0.6931472
      %v859 = vlog2.pop %v828
      %v860 = vmul.f32 %v859, 0.6931472
      %v861 = vlog2.pop %v830
      %v862 = vmul.f32 %v861, 0.6931472
      %v863 = vlog2.pop %v832
      %v864 = vmul.f32 %v863, 0.6931472
      %v865 = vlog2.pop %v834
      %v866 = vmul.f32 %v865, 0.6931472
      %v867 = vlog2.pop %v836
      %v868 = vmul.f32 %v867, 0.6931472
      %v869 = vlog2.pop %v838
      %v870 = vmul.f32 %v869, 0.6931472
      %v871 = vlog2.pop %v840
      %v872 = vmul.f32 %v871, 0.6931472
      %v873 = vlog2.pop %v842
      %v874 = vmul.f32 %v873, 0.6931472
      %v875 = vlog2.pop %v844
      %v876 = vmul.f32 %v875, 0.6931472
      %v877 = vlog2.pop %v846
      %v878 = vmul.f32 %v877, 0.6931472
      %v879 = vlog2.pop %v848
      %v880 = vmul.f32 %v879, 0.6931472
      %v881 = vlog2.pop %v850
      %v882 = vmul.f32 %v881, 0.6931472
      %v883 = vlog2.pop %v852
      %v884 = vmul.f32 %v883, 0.6931472
      %v885 = vlog2.pop %v854
      %v886 = vmul.f32 %v885, 0.6931472
      %v887 = vlog2.pop %v856
      %v888 = vmul.f32 %v887, 0.6931472
      %v889 = vsub.f32 %v777, %v858
      %v890 = vsub.f32 %v778, %v860
      %v891 = vsub.f32 %v779, %v862
      %v892 = vsub.f32 %v780, %v864
      %v893 = vsub.f32 %v781, %v866
      %v894 = vsub.f32 %v782, %v868
      %v895 = vsub.f32 %v783, %v870
      %v896 = vsub.f32 %v784, %v872
      %v897 = vsub.f32 %v785, %v874
      %v898 = vsub.f32 %v786, %v876
      %v899 = vsub.f32 %v787, %v878
      %v900 = vsub.f32 %v788, %v880
      %v901 = vsub.f32 %v789, %v882
      %v902 = vsub.f32 %v790, %v884
      %v903 = vsub.f32 %v791, %v886
      %v904 = vsub.f32 %v792, %v888
      %905 = vst [vmem:[%s280] sm:$0xff] %v889
      %906 = vst [vmem:[%s280 + $0x8] sm:$0xff] %v890
      %907 = vst [vmem:[%s280 + $0x10] sm:$0xff] %v891
      %908 = vst [vmem:[%s280 + $0x18] sm:$0xff] %v892
      %909 = vst [vmem:[%s280 + $0x20] sm:$0xff] %v893
      %910 = vst [vmem:[%s280 + $0x28] sm:$0xff] %v894
      %911 = vst [vmem:[%s280 + $0x30] sm:$0xff] %v895
      %912 = vst [vmem:[%s280 + $0x38] sm:$0xff] %v896
      %913 = vst [vmem:[%s280 + $0x40] sm:$0xff] %v897
      %914 = vst [vmem:[%s280 + $0x48] sm:$0xff] %v898
      %915 = vst [vmem:[%s280 + $0x50] sm:$0xff] %v899
      %916 = vst [vmem:[%s280 + $0x58] sm:$0xff] %v900
      %917 = vst [vmem:[%s280 + $0x60] sm:$0xff] %v901
      %918 = vst [vmem:[%s280 + $0x68] sm:$0xff] %v902
      %919 = vst [vmem:[%s280 + $0x70] sm:$0xff] %v903
      %920 = vst [vmem:[%s280 + $0x78] sm:$0xff] %v904
      %s921 = smul.u32 16, %s18
      %p922 = scmp.lt.s32.totalorder %s921, 31
      %s923 = scalar_select %p922, %s921, 31
      %s924 = smul.addr %s923, 8
      %s925 = scalar_lea.vmem %s7, %s924
      // Predicated region
      $region49: #{discriminator_forward.1} parent=47 // pred_check
        %p926 = pneg %p188
      $region50: #{discriminator_forward.1} parent=47 // pred_check_branch
        %928 = sbr.rel (%p926) target = $region52
      $region51: #{discriminator_forward.1} parent=47 // pred_region
        %s929 = smul.u32 16, %s18
      $region52: #{discriminator_forward.1} parent=47 // pred_fallthru
        _
    $region48: #{discriminator_forward.1} parent=5 // pred_fallthru
      _
    %p930 = scmp.le.s32.totalorder 2, %s13
    // Predicated region
    $region53: #{discriminator_forward.1} parent=5 // pred_check
      %p931 = pneg %p930
    $region54: #{discriminator_forward.1} parent=5 // pred_check_branch
      %933 = sbr.rel (%p931) target = $region56
    $region55: #{discriminator_forward.1} parent=5 // pred_region
      %s934 = ssub.s32 %s13, 2
      // Predicated region
      $region57: #{discriminator_forward.1} parent=55 // pred_check
        %p935 = pneg %p194
      $region58: #{discriminator_forward.1} parent=55 // pred_check_branch
        %937 = sbr.rel (%p935) target = $region60
      $region59: #{discriminator_forward.1} parent=55 // pred_region
        %s938 = smul.u32 16, %s19
        %p939 = scmp.lt.s32.totalorder %s938, 31
        %s940 = scalar_select %p939, %s938, 31
        %s941 = smul.addr %s940, 8
        %s942 = scalar_lea.vmem %s7, %s941
      $region60: #{discriminator_forward.1} parent=55 // pred_fallthru
        _
    $region56: #{discriminator_forward.1} parent=5 // pred_fallthru
      _
  $region6: #{discriminator_forward.1} parent=0 // loop_footer
    %s17 = sadd.s32 1, %s13
  $region7: #{discriminator_forward.1} parent=0 // loop_footer_branch
    %12 = sbr.rel target = $region3
  $region8: #{discriminator_forward.1} parent=0 // loop_exit
    _

</llo_original>
